<compile_context>
chip_gen: v5e
topology: v5e:2x2
jax: 0.10.0
libtpu: 0.0.40
codegen_flags: <defaults>
</compile_context>

<pallas_src>
import jax
import jax.numpy as jnp
from jax.experimental import pallas as pl
from jax.experimental.pallas import tpu as pltpu

LOG_SIG_MAX = 2.0
LOG_SIG_MIN = -20.0
LANE = 128
SUBLANE = 8
MAX_TB = 2048          # batch-tile cap (review: 1024-2048; per-step overhead amortized)


def _round_up(x, m):
    return (x + m - 1) // m * m


# --------------------------------------------------------------------------------------
# Kernel: x -> relu(x@W1+b1) -> relu(.@W2+b2) -> .@W_heads + b_heads -> col-wise clamp
# --------------------------------------------------------------------------------------
def gaussian_policy_kernel(x_ref, w1_ref, b1_ref, w2_ref, b2_ref, wh_ref, bh_ref,
                           lo_ref, hi_ref, y_ref):
    x = x_ref[...]

    h = jnp.dot(x, w1_ref[...], preferred_element_type=jnp.float32) + b1_ref[...]
    h = jnp.maximum(h, 0.0)
    h = jnp.dot(h, w2_ref[...], preferred_element_type=jnp.float32) + b2_ref[...]
    h = jnp.maximum(h, 0.0)

    # Fused (collapsed) mean / log_std heads in one lane-dense matmul.
    y = jnp.dot(h, wh_ref[...], preferred_element_type=jnp.float32) + bh_ref[...]

    # Column-wise clamp via precomputed lo/hi rows: -inf/+inf everywhere except the
    # log_std columns [A, 2A), so mean and padding columns pass through untouched.
    y = jnp.minimum(jnp.maximum(y, lo_ref[...]), hi_ref[...])

    y_ref[...] = y.astype(y_ref.dtype)


# --------------------------------------------------------------------------------------
# One-time parameter preparation (fold permute, collapse + fuse heads, pad lanes to 128)
# --------------------------------------------------------------------------------------
def prepare_params(params, num_inputs, num_actions, sequence_length, hidden_dim):
    (w1, b1, w2, b2, wm1, bm1, wm2, bm2, wl1, bl1, wl2, bl2) = params
    S, A, I, H = sequence_length, num_actions, num_inputs, hidden_dim
    next_dim = S * A * I

    # 1) Fold the state permute([0,2,1,3])+flatten into a w1 row reorder:
    #    original row r = s*A*I + a*I + i  ->  new row r' = a*S*I + s*I + i,
    #    so the kernel consumes state.reshape(B, A*S*I) directly.
    w1f = w1.reshape(S, A, I, H).transpose(1, 0, 2, 3).reshape(next_dim, H)

    # 2) Collapse each head's two Linears (no nonlinearity in between => exact algebra).
    wm = wm1 @ wm2
    bm = bm1 @ wm2 + bm2
    wl = wl1 @ wl2
    bl = bl1 @ wl2 + bl2

    # 3) Fuse both heads: columns [0:A] = mean, [A:2A] = log_std.
    wh = jnp.concatenate([wm, wl], axis=1)      # [H, 2A]
    bh = jnp.concatenate([bm, bl], axis=1)      # [1, 2A]

    # 4) Zero-pad only the hidden/output lane dims to 128.  The contraction dim K
    #    (= next_dim) stays UNPADDED: the x BlockSpec uses the full last dim, so no
    #    wrapper-side jnp.pad pass over the activation stream is needed.
    Hp = _round_up(H, LANE)
    OUTP = _round_up(2 * A, LANE)

    w1p = jnp.zeros((next_dim, Hp), jnp.float32).at[:, :H].set(w1f)
    b1p = jnp.zeros((1, Hp), jnp.float32).at[:, :H].set(b1)
    w2p = jnp.zeros((Hp, Hp), jnp.float32).at[:H, :H].set(w2)
    b2p = jnp.zeros((1, Hp), jnp.float32).at[:, :H].set(b2)
    whp = jnp.zeros((Hp, OUTP), jnp.float32).at[:H, :2 * A].set(wh)
    bhp = jnp.zeros((1, OUTP), jnp.float32).at[:, :2 * A].set(bh)

    # 5) Loop-invariant per-column clamp bounds (replace per-step iota/cmp/select).
    lo = jnp.full((1, OUTP), -jnp.inf, jnp.float32).at[:, A:2 * A].set(LOG_SIG_MIN)
    hi = jnp.full((1, OUTP), jnp.inf, jnp.float32).at[:, A:2 * A].set(LOG_SIG_MAX)

    return (w1p, b1p, w2p, b2p, whp, bhp, lo, hi)


# --------------------------------------------------------------------------------------
# Batch-tile selection
# --------------------------------------------------------------------------------------
def _pick_batch_tile(B, bytes_per_row):
    cand = _round_up(B, SUBLANE)
    tb = min(cand, MAX_TB)
    # VMEM safety for very wide K: keep double-buffered x/y tiles under ~24 MiB.
    vmem_rows = max(SUBLANE, ((24 << 20) // (2 * bytes_per_row)) // SUBLANE * SUBLANE)
    tb = min(tb, vmem_rows)
    if cand > SUBLANE:
        # Keep >= 2 grid steps so v7x's two TensorCores both get work via the
        # "parallel" batch axis; v5e/v6e (single TC) are unaffected.
        tb = min(tb, _round_up(pl.cdiv(B, 2), SUBLANE))
    return max(tb, SUBLANE)


# --------------------------------------------------------------------------------------
# Forward wrapper
# --------------------------------------------------------------------------------------
def gaussian_policy_forward(state, prepped, num_actions, out_dtype=jnp.bfloat16):
    """state: [B, num_actions, seq_len, num_inputs] float32 (raw, un-permuted)."""
    (w1p, b1p, w2p, b2p, whp, bhp, lo, hi) = prepped
    B, A, S, I = state.shape
    K, Hp = w1p.shape
    OUTP = whp.shape[1]
    assert A * S * I == K and A == num_actions

    # Permute folded into w1p row order -> plain reshape; NO pad / transpose passes.
    x = state.reshape(B, K)

    out_isz = jnp.dtype(out_dtype).itemsize
    TB = _pick_batch_tile(B, K * 4 + OUTP * out_isz)
    grid = (pl.cdiv(B, TB),)   # ragged last block: out-of-range rows discarded on write

    # Explicit VMEM budget: double-buffered x/y tiles + (conservatively doubled)
    # resident weights + headroom.  Matters for v5e's 16 MiB scoped default.
    wbytes = 4 * (w1p.size + b1p.size + w2p.size + b2p.size +
                  whp.size + bhp.size + lo.size + hi.size)
    est = 2 * (TB * K * 4 + TB * OUTP * out_isz) + 2 * wbytes + (2 << 20)
    vmem_limit = int(min(max(est, 16 << 20), 64 << 20))

    y = pl.pallas_call(
        gaussian_policy_kernel,
        out_shape=jax.ShapeDtypeStruct((B, OUTP), out_dtype),
        grid=grid,
        in_specs=[
            pl.BlockSpec((TB, K), lambda i: (i, 0)),        # activation tile (full K)
            pl.BlockSpec((K, Hp), lambda i: (0, 0)),        # weights: VMEM-resident
            pl.BlockSpec((1, Hp), lambda i: (0, 0)),
            pl.BlockSpec((Hp, Hp), lambda i: (0, 0)),
            pl.BlockSpec((1, Hp), lambda i: (0, 0)),
            pl.BlockSpec((Hp, OUTP), lambda i: (0, 0)),
            pl.BlockSpec((1, OUTP), lambda i: (0, 0)),
            pl.BlockSpec((1, OUTP), lambda i: (0, 0)),      # lo (clamp bounds)
            pl.BlockSpec((1, OUTP), lambda i: (0, 0)),      # hi (clamp bounds)
        ],
        out_specs=pl.BlockSpec((TB, OUTP), lambda i: (i, 0)),
        compiler_params=pltpu.CompilerParams(
            dimension_semantics=("parallel",),
            vmem_limit_bytes=vmem_limit),
    )(x, w1p, b1p, w2p, b2p, whp, bhp, lo, hi)

    mean = y[:, :num_actions].astype(jnp.float32)
    log_std = y[:, num_actions:2 * num_actions].astype(jnp.float32)
    return mean, log_std


# --------------------------------------------------------------------------------------
# Parameter init (matches nn.Linear + xavier_uniform_, stored as [in, out] = W.T)
# --------------------------------------------------------------------------------------
def xavier_uniform(key, fan_in, fan_out):
    bound = jnp.sqrt(6.0 / (fan_in + fan_out))
    return jax.random.uniform(key, (fan_in, fan_out), jnp.float32, -bound, bound)


def make_params(key, next_dim, hidden_dim, num_actions):
    keys = jax.random.split(key, 6)
    w1 = xavier_uniform(keys[0], next_dim, hidden_dim)
    b1 = jnp.zeros((1, hidden_dim), jnp.float32)
    w2 = xavier_uniform(keys[1], hidden_dim, hidden_dim)
    b2 = jnp.zeros((1, hidden_dim), jnp.float32)
    wm1 = xavier_uniform(keys[2], hidden_dim, hidden_dim)
    bm1 = jnp.zeros((1, hidden_dim), jnp.float32)
    wm2 = xavier_uniform(keys[3], hidden_dim, num_actions)
    bm2 = jnp.zeros((1, num_actions), jnp.float32)
    wl1 = xavier_uniform(keys[4], hidden_dim, hidden_dim)
    bl1 = jnp.zeros((1, hidden_dim), jnp.float32)
    wl2 = xavier_uniform(keys[5], hidden_dim, num_actions)
    bl2 = jnp.zeros((1, num_actions), jnp.float32)
    return (w1, b1, w2, b2, wm1, bm1, wm2, bm2, wl1, bl1, wl2, bl2)


def reference_forward(state, params):
    """Pure-JAX reference matching the PyTorch forward exactly (f32)."""
    B = state.shape[0]
    s = jnp.transpose(state, (0, 2, 1, 3)).reshape(B, -1)
    (w1, b1, w2, b2, wm1, bm1, wm2, bm2, wl1, bl1, wl2, bl2) = params
    h = jax.nn.relu(s @ w1 + b1)
    h = jax.nn.relu(h @ w2 + b2)
    m = (h @ wm1 + bm1) @ wm2 + bm2
    ls = (h @ wl1 + bl1) @ wl2 + bl2
    return m, jnp.clip(ls, LOG_SIG_MIN, LOG_SIG_MAX)


if __name__ == "__main__":
    # Small shapes consistent with the module (Identity-encoder branch).
    num_inputs = 4
    num_actions = 4
    sequence_length = 8
    hidden_dim = 32
    next_dim = num_inputs * num_actions * sequence_length  # 128

    key = jax.random.PRNGKey(0)
    k_state, k_state2, k_params = jax.random.split(key, 3)

    params = make_params(k_params, next_dim, hidden_dim, num_actions)
    prepped = prepare_params(params, num_inputs, num_actions, sequence_length, hidden_dim)

    # Case 1: tiny batch (grid = 1, block bigger than batch; masked store).
    batch = 2
    state = jax.random.normal(
        k_state, (batch, num_actions, sequence_length, num_inputs), jnp.float32)
    mean, log_std = gaussian_policy_forward(state, prepped, num_actions)
    mean, log_std = jax.block_until_ready((mean, log_std))
    ref_mean, ref_log_std = reference_forward(state, params)
    assert mean.shape == (batch, num_actions)
    assert log_std.shape == (batch, num_actions)
    # bf16 output slab (HBM-writeback cut) -> tolerance at bf16 rounding level.
    assert jnp.allclose(mean, ref_mean, atol=1e-2, rtol=1e-2)
    assert jnp.allclose(log_std, ref_log_std, atol=1e-2, rtol=1e-2)

    # Case 2: batch that exercises >= 2 grid steps and a ragged last block.
    batch2 = 20
    state2 = jax.random.normal(
        k_state2, (batch2, num_actions, sequence_length, num_inputs), jnp.float32)
    mean2, log_std2 = gaussian_policy_forward(state2, prepped, num_actions)
    mean2, log_std2 = jax.block_until_ready((mean2, log_std2))
    ref_mean2, ref_log_std2 = reference_forward(state2, params)
    assert mean2.shape == (batch2, num_actions)
    assert log_std2.shape == (batch2, num_actions)
    assert jnp.allclose(mean2, ref_mean2, atol=1e-2, rtol=1e-2)
    assert jnp.allclose(log_std2, ref_log_std2, atol=1e-2, rtol=1e-2)

    print("KERNEL_OK")
</pallas_src>

<mosaic_0001>
module attributes {stable_mosaic.version = 11 : i64} {
  func.func @gaussian_policy_kernel(%arg0: i32, %arg1: memref<8x128xf32, #tpu.memory_space<vmem>>, %arg2: memref<128x128xf32, #tpu.memory_space<vmem>>, %arg3: memref<1x128xf32, #tpu.memory_space<vmem>>, %arg4: memref<128x128xf32, #tpu.memory_space<vmem>>, %arg5: memref<1x128xf32, #tpu.memory_space<vmem>>, %arg6: memref<128x128xf32, #tpu.memory_space<vmem>>, %arg7: memref<1x128xf32, #tpu.memory_space<vmem>>, %arg8: memref<1x128xf32, #tpu.memory_space<vmem>>, %arg9: memref<1x128xf32, #tpu.memory_space<vmem>>, %arg10: memref<8x128xbf16, #tpu.memory_space<vmem>>) attributes {dimension_semantics = [#tpu.dimension_semantics<parallel>], iteration_bounds = array<i64: 1>, scalar_prefetch = 0 : i64, scratch_operands = 0 : i64, tpu.core_type = #tpu.core_type<tc>, window_params = [{transform_indices = @transform_0, window_bounds = array<i64: 8, 128>}, {pipeline_mode = #tpu.pipeline_mode<synchronous>, transform_indices = @transform_1, window_bounds = array<i64: 128, 128>}, {pipeline_mode = #tpu.pipeline_mode<synchronous>, transform_indices = @transform_2, window_bounds = array<i64: 1, 128>}, {pipeline_mode = #tpu.pipeline_mode<synchronous>, transform_indices = @transform_3, window_bounds = array<i64: 128, 128>}, {pipeline_mode = #tpu.pipeline_mode<synchronous>, transform_indices = @transform_4, window_bounds = array<i64: 1, 128>}, {pipeline_mode = #tpu.pipeline_mode<synchronous>, transform_indices = @transform_5, window_bounds = array<i64: 128, 128>}, {pipeline_mode = #tpu.pipeline_mode<synchronous>, transform_indices = @transform_6, window_bounds = array<i64: 1, 128>}, {pipeline_mode = #tpu.pipeline_mode<synchronous>, transform_indices = @transform_7, window_bounds = array<i64: 1, 128>}, {pipeline_mode = #tpu.pipeline_mode<synchronous>, transform_indices = @transform_8, window_bounds = array<i64: 1, 128>}, {transform_indices = @transform_9, window_bounds = array<i64: 8, 128>}]} {
    %c0 = arith.constant 0 : index
    %c0_0 = arith.constant 0 : index
    %0 = vector.load %arg1[%c0, %c0_0] : memref<8x128xf32, #tpu.memory_space<vmem>>, vector<8x128xf32>
    %c0_1 = arith.constant 0 : index
    %c0_2 = arith.constant 0 : index
    %1 = vector.load %arg2[%c0_1, %c0_2] : memref<128x128xf32, #tpu.memory_space<vmem>>, vector<128x128xf32>
    %cst = arith.constant dense<0.000000e+00> : vector<8x128xf32>
    %2 = tpu.matmul %0, %1, %cst {dimension_numbers = #tpu.dot_dimension_numbers<[1], [0], [0], [1], [0, 0, 1, 1], [], []>} : vector<8x128xf32>, vector<128x128xf32>, vector<8x128xf32> -> vector<8x128xf32>
    %c0_3 = arith.constant 0 : index
    %c0_4 = arith.constant 0 : index
    %3 = vector.load %arg3[%c0_3, %c0_4] : memref<1x128xf32, #tpu.memory_space<vmem>>, vector<1x128xf32>
    %4 = vector.broadcast %3 : vector<1x128xf32> to vector<8x128xf32>
    %5 = arith.addf %2, %4 : vector<8x128xf32>
    %cst_5 = arith.constant 0.000000e+00 : f32
    %6 = vector.broadcast %cst_5 : f32 to vector<8x128xf32>
    %7 = arith.maximumf %5, %6 : vector<8x128xf32>
    %c0_6 = arith.constant 0 : index
    %c0_7 = arith.constant 0 : index
    %8 = vector.load %arg4[%c0_6, %c0_7] : memref<128x128xf32, #tpu.memory_space<vmem>>, vector<128x128xf32>
    %cst_8 = arith.constant dense<0.000000e+00> : vector<8x128xf32>
    %9 = tpu.matmul %7, %8, %cst_8 {dimension_numbers = #tpu.dot_dimension_numbers<[1], [0], [0], [1], [0, 0, 1, 1], [], []>} : vector<8x128xf32>, vector<128x128xf32>, vector<8x128xf32> -> vector<8x128xf32>
    %c0_9 = arith.constant 0 : index
    %c0_10 = arith.constant 0 : index
    %10 = vector.load %arg5[%c0_9, %c0_10] : memref<1x128xf32, #tpu.memory_space<vmem>>, vector<1x128xf32>
    %11 = vector.broadcast %10 : vector<1x128xf32> to vector<8x128xf32>
    %12 = arith.addf %9, %11 : vector<8x128xf32>
    %cst_11 = arith.constant 0.000000e+00 : f32
    %13 = vector.broadcast %cst_11 : f32 to vector<8x128xf32>
    %14 = arith.maximumf %12, %13 : vector<8x128xf32>
    %c0_12 = arith.constant 0 : index
    %c0_13 = arith.constant 0 : index
    %15 = vector.load %arg6[%c0_12, %c0_13] : memref<128x128xf32, #tpu.memory_space<vmem>>, vector<128x128xf32>
    %cst_14 = arith.constant dense<0.000000e+00> : vector<8x128xf32>
    %16 = tpu.matmul %14, %15, %cst_14 {dimension_numbers = #tpu.dot_dimension_numbers<[1], [0], [0], [1], [0, 0, 1, 1], [], []>} : vector<8x128xf32>, vector<128x128xf32>, vector<8x128xf32> -> vector<8x128xf32>
    %c0_15 = arith.constant 0 : index
    %c0_16 = arith.constant 0 : index
    %17 = vector.load %arg7[%c0_15, %c0_16] : memref<1x128xf32, #tpu.memory_space<vmem>>, vector<1x128xf32>
    %18 = vector.broadcast %17 : vector<1x128xf32> to vector<8x128xf32>
    %19 = arith.addf %16, %18 : vector<8x128xf32>
    %c0_17 = arith.constant 0 : index
    %c0_18 = arith.constant 0 : index
    %20 = vector.load %arg8[%c0_17, %c0_18] : memref<1x128xf32, #tpu.memory_space<vmem>>, vector<1x128xf32>
    %21 = vector.broadcast %20 : vector<1x128xf32> to vector<8x128xf32>
    %22 = arith.maximumf %19, %21 : vector<8x128xf32>
    %c0_19 = arith.constant 0 : index
    %c0_20 = arith.constant 0 : index
    %23 = vector.load %arg9[%c0_19, %c0_20] : memref<1x128xf32, #tpu.memory_space<vmem>>, vector<1x128xf32>
    %24 = vector.broadcast %23 : vector<1x128xf32> to vector<8x128xf32>
    %25 = arith.minimumf %22, %24 : vector<8x128xf32>
    %26 = arith.truncf %25 : vector<8x128xf32> to vector<8x128xbf16>
    %c0_21 = arith.constant 0 : index
    %c0_22 = arith.constant 0 : index
    %27 = vector.load %arg10[%c0_21, %c0_22] : memref<8x128xbf16, #tpu.memory_space<vmem>>, vector<8x128xbf16>
    tpu.vector_store %arg10[%c0_21, %c0_22], %26 {strides = array<i32>} : memref<8x128xbf16, #tpu.memory_space<vmem>>, vector<8x128xbf16>,
    return
  }
  func.func @transform_0(%arg0: i32) -> (i32, i32) {
    %c0_i32 = arith.constant 0 : i32
    %c0_i32_0 = arith.constant 0 : i32
    return %arg0, %c0_i32 : i32, i32
  }
  func.func @transform_1(%arg0: i32) -> (i32, i32) {
    %c0_i32 = arith.constant 0 : i32
    %c0_i32_0 = arith.constant 0 : i32
    %c0_i32_1 = arith.constant 0 : i32
    return %c0_i32, %c0_i32_0 : i32, i32
  }
  func.func @transform_2(%arg0: i32) -> (i32, i32) {
    %c0_i32 = arith.constant 0 : i32
    %c0_i32_0 = arith.constant 0 : i32
    %c0_i32_1 = arith.constant 0 : i32
    return %c0_i32, %c0_i32_0 : i32, i32
  }
  func.func @transform_3(%arg0: i32) -> (i32, i32) {
    %c0_i32 = arith.constant 0 : i32
    %c0_i32_0 = arith.constant 0 : i32
    %c0_i32_1 = arith.constant 0 : i32
    return %c0_i32, %c0_i32_0 : i32, i32
  }
  func.func @transform_4(%arg0: i32) -> (i32, i32) {
    %c0_i32 = arith.constant 0 : i32
    %c0_i32_0 = arith.constant 0 : i32
    %c0_i32_1 = arith.constant 0 : i32
    return %c0_i32, %c0_i32_0 : i32, i32
  }
  func.func @transform_5(%arg0: i32) -> (i32, i32) {
    %c0_i32 = arith.constant 0 : i32
    %c0_i32_0 = arith.constant 0 : i32
    %c0_i32_1 = arith.constant 0 : i32
    return %c0_i32, %c0_i32_0 : i32, i32
  }
  func.func @transform_6(%arg0: i32) -> (i32, i32) {
    %c0_i32 = arith.constant 0 : i32
    %c0_i32_0 = arith.constant 0 : i32
    %c0_i32_1 = arith.constant 0 : i32
    return %c0_i32, %c0_i32_0 : i32, i32
  }
  func.func @transform_7(%arg0: i32) -> (i32, i32) {
    %c0_i32 = arith.constant 0 : i32
    %c0_i32_0 = arith.constant 0 : i32
    %c0_i32_1 = arith.constant 0 : i32
    return %c0_i32, %c0_i32_0 : i32, i32
  }
  func.func @transform_8(%arg0: i32) -> (i32, i32) {
    %c0_i32 = arith.constant 0 : i32
    %c0_i32_0 = arith.constant 0 : i32
    %c0_i32_1 = arith.constant 0 : i32
    return %c0_i32, %c0_i32_0 : i32, i32
  }
  func.func @transform_9(%arg0: i32) -> (i32, i32) {
    %c0_i32 = arith.constant 0 : i32
    %c0_i32_0 = arith.constant 0 : i32
    return %arg0, %c0_i32 : i32, i32
  }
}

</mosaic_0001>

<llo_original>
// kernel: tpu_custom_call.1
$region0: #{tpu_custom_call.1}
  #allocation0 [shape = 'u32[]', space=smem, size = 0x4, offset = 0x4, fixed_abs, tag = 'smem constant byte address 0x4 - core index']
  #allocation1 [shape = 'u32[72,128]{1,0:T(1,128)}', space=vmem, size = 0x9000, scoped, tag = 'internal scratch']
  %s0 = inlined_call_operand.hbm [shape: f32[2,128], index: 0, kind: input, shape index: {}]
  %s1 = inlined_call_operand.hbm [shape: f32[128,128], index: 1, kind: input, shape index: {}]
  %s2 = inlined_call_operand.vmem [shape: f32[1,128], index: 2, kind: input, shape index: {}]
  %s3 = inlined_call_operand.hbm [shape: f32[128,128], index: 3, kind: input, shape index: {}]
  %s4 = inlined_call_operand.vmem [shape: f32[1,128], index: 4, kind: input, shape index: {}]
  %s5 = inlined_call_operand.hbm [shape: f32[128,128], index: 5, kind: input, shape index: {}]
  %s6 = inlined_call_operand.vmem [shape: f32[1,128], index: 6, kind: input, shape index: {}]
  %s7 = inlined_call_operand.vmem [shape: f32[1,128], index: 7, kind: input, shape index: {}]
  %s8 = inlined_call_operand.vmem [shape: f32[1,128], index: 8, kind: input, shape index: {}]
  %s9 = inlined_call_operand.hbm [shape: bf16[2,128], index: 9, kind: output, shape index: {}]
  %s10 = sld [smem:[#allocation0]]
  $region62: #{tpu_custom_call.1} parent=0
    _
  %s12 = ssub.s32 1, %s10
  %s13 = scalar_select 0, %s12, %s10
  $region1: #{tpu_custom_call.1} parent=0
    #allocation2 [shape = 'u8[4096]{0}', space=vmem, size = 0x1000, scoped, tag = 'input window, operand 0, single buffered']
    #allocation3 [shape = 's32[1]{0}', space=sflag, size = 0x4, scoped, tag = 'scoped memory for tpu_custom_call.1']
    #allocation4 [shape = 's32[1]{0}', space=sflag, size = 0x4, scoped, tag = 'scoped memory for tpu_custom_call.1']
    #allocation5 [shape = 'u8[65536]{0}', space=vmem, size = 0x10000, scoped, tag = 'input window, operand 1, single buffered']
    #allocation6 [shape = 's32[1]{0}', space=sflag, size = 0x4, scoped, tag = 'scoped memory for tpu_custom_call.1']
    #allocation7 [shape = 'u8[65536]{0}', space=vmem, size = 0x10000, scoped, tag = 'input window, operand 3, single buffered']
    #allocation8 [shape = 'u8[65536]{0}', space=vmem, size = 0x10000, scoped, tag = 'input window, operand 5, single buffered']
    #allocation9 [shape = 's32[1]{0}', space=sflag, size = 0x4, scoped, tag = 'scoped memory for tpu_custom_call.1']
    #allocation10 [shape = 'u8[2048]{0}', space=vmem, size = 0x800, scoped, tag = 'output window, operand 0, single buffered']
    %14 = vsyncpa [#allocation3], 0
    %15 = vsyncpa [#allocation6], 0
    %16 = vsyncpa [#allocation9], 0
    %17 = vsyncpa [#allocation4], 0
    // Predicated region
    $region2: #{tpu_custom_call.1} parent=1 // pred_check
      _
    $region3: #{tpu_custom_call.1} parent=1 // pred_check_branch
      %19 = sbr.rel (0) target = $region5
    $region4: #{tpu_custom_call.1} parent=1 // pred_region
      %21 = vsyncadd [#allocation3], 96
      %s22 = sshll.u32 %s0, 4
      %s23 = int_to_ptr.hbm [resolvable:$true] %s22
      %s24 = sshll.u32 [#allocation2], 4
      %s25 = int_to_ptr.vmem [resolvable:$true] %s24
      %30 = dma.hbm_to_vmem [thread:$0]  %s23, 32, %s25, [#allocation3], 32, 32, 2
    $region5: #{tpu_custom_call.1} parent=1 // pred_fallthru
      _
    // Predicated region
    $region6: #{tpu_custom_call.1} parent=1 // pred_check
      _
    $region7: #{tpu_custom_call.1} parent=1 // pred_check_branch
      %32 = sbr.rel (0) target = $region9
    $region8: #{tpu_custom_call.1} parent=1 // pred_region
      %34 = vsyncadd [#allocation6], 0
      %s35 = sshll.u32 %s1, 4
      %s36 = int_to_ptr.hbm [resolvable:$true] %s35
      %s37 = sshll.u32 [#allocation5], 4
      %s38 = int_to_ptr.vmem [resolvable:$true] %s37
      %43 = dma.hbm_to_vmem [thread:$0]  %s36, 2048, %s38, [#allocation6], 128, 128, 8
    $region9: #{tpu_custom_call.1} parent=1 // pred_fallthru
      _
    // Predicated region
    $region10: #{tpu_custom_call.1} parent=1 // pred_check
      _
    $region11: #{tpu_custom_call.1} parent=1 // pred_check_branch
      %45 = sbr.rel (0) target = $region13
    $region12: #{tpu_custom_call.1} parent=1 // pred_region
      _
    $region13: #{tpu_custom_call.1} parent=1 // pred_fallthru
      _
    // Predicated region
    $region14: #{tpu_custom_call.1} parent=1 // pred_check
      _
    $region15: #{tpu_custom_call.1} parent=1 // pred_check_branch
      %47 = sbr.rel (0) target = $region17
    $region16: #{tpu_custom_call.1} parent=1 // pred_region
      %49 = vsyncadd [#allocation6], 0
      %s50 = sshll.u32 %s3, 4
      %s51 = int_to_ptr.hbm [resolvable:$true] %s50
      %s52 = sshll.u32 [#allocation7], 4
      %s53 = int_to_ptr.vmem [resolvable:$true] %s52
      %58 = dma.hbm_to_vmem [thread:$0]  %s51, 2048, %s53, [#allocation6], 128, 128, 8
    $region17: #{tpu_custom_call.1} parent=1 // pred_fallthru
      _
    // Predicated region
    $region18: #{tpu_custom_call.1} parent=1 // pred_check
      _
    $region19: #{tpu_custom_call.1} parent=1 // pred_check_branch
      %60 = sbr.rel (0) target = $region21
    $region20: #{tpu_custom_call.1} parent=1 // pred_region
      _
    $region21: #{tpu_custom_call.1} parent=1 // pred_fallthru
      _
    // Predicated region
    $region22: #{tpu_custom_call.1} parent=1 // pred_check
      _
    $region23: #{tpu_custom_call.1} parent=1 // pred_check_branch
      %62 = sbr.rel (0) target = $region25
    $region24: #{tpu_custom_call.1} parent=1 // pred_region
      %64 = vsyncadd [#allocation9], 0
      %s65 = sshll.u32 %s5, 4
      %s66 = int_to_ptr.hbm [resolvable:$true] %s65
      %s67 = sshll.u32 [#allocation8], 4
      %s68 = int_to_ptr.vmem [resolvable:$true] %s67
      %73 = dma.hbm_to_vmem [thread:$0]  %s66, 2048, %s68, [#allocation9], 128, 128, 8
    $region25: #{tpu_custom_call.1} parent=1 // pred_fallthru
      _
    // Predicated region
    $region26: #{tpu_custom_call.1} parent=1 // pred_check
      _
    $region27: #{tpu_custom_call.1} parent=1 // pred_check_branch
      %75 = sbr.rel (0) target = $region29
    $region28: #{tpu_custom_call.1} parent=1 // pred_region
      _
    $region29: #{tpu_custom_call.1} parent=1 // pred_fallthru
      _
    // Predicated region
    $region30: #{tpu_custom_call.1} parent=1 // pred_check
      _
    $region31: #{tpu_custom_call.1} parent=1 // pred_check_branch
      %77 = sbr.rel (0) target = $region33
    $region32: #{tpu_custom_call.1} parent=1 // pred_region
      _
    $region33: #{tpu_custom_call.1} parent=1 // pred_fallthru
      _
    // Predicated region
    $region34: #{tpu_custom_call.1} parent=1 // pred_check
      _
    $region35: #{tpu_custom_call.1} parent=1 // pred_check_branch
      %79 = sbr.rel (0) target = $region37
    $region36: #{tpu_custom_call.1} parent=1 // pred_region
      _
    $region37: #{tpu_custom_call.1} parent=1 // pred_fallthru
      _
    // Predicated region
    $region38: #{tpu_custom_call.1} parent=1 // pred_check
      _
    $region39: #{tpu_custom_call.1} parent=1 // pred_check_branch
      %81 = sbr.rel (0) target = $region41
    $region40: #{tpu_custom_call.1} parent=1 // pred_region
      %83 = dma.done [#allocation3], 128
    $region41: #{tpu_custom_call.1} parent=1 // pred_fallthru
      _
    // Predicated region
    $region42: #{tpu_custom_call.1} parent=1 // pred_check
      _
    $region43: #{tpu_custom_call.1} parent=1 // pred_check_branch
      %85 = sbr.rel (0) target = $region45
    $region44: #{tpu_custom_call.1} parent=1 // pred_region
      %87 = dma.done [#allocation6], 2048
    $region45: #{tpu_custom_call.1} parent=1 // pred_fallthru
      _
    // Predicated region
    $region46: #{tpu_custom_call.1} parent=1 // pred_check
      _
    $region47: #{tpu_custom_call.1} parent=1 // pred_check_branch
      %89 = sbr.rel (0) target = $region49
    $region48: #{tpu_custom_call.1} parent=1 // pred_region
      %91 = dma.done [#allocation6], 2048
    $region49: #{tpu_custom_call.1} parent=1 // pred_fallthru
      _
    // Predicated region
    $region50: #{tpu_custom_call.1} parent=1 // pred_check
      _
    $region51: #{tpu_custom_call.1} parent=1 // pred_check_branch
      %93 = sbr.rel (0) target = $region53
    $region52: #{tpu_custom_call.1} parent=1 // pred_region
      %95 = dma.done [#allocation9], 2048
    $region53: #{tpu_custom_call.1} parent=1 // pred_fallthru
      _
    %v96 = vld [vmem:[#allocation2] sm:$0xff]
    %v97 = vld [vmem:[#allocation5] sm:$0xff]
    %v98 = vld [vmem:[#allocation5 + $0x8] sm:$0xff]
    %v99 = vld [vmem:[#allocation5 + $0x10] sm:$0xff]
    %v100 = vld [vmem:[#allocation5 + $0x18] sm:$0xff]
    %v101 = vld [vmem:[#allocation5 + $0x20] sm:$0xff]
    %v102 = vld [vmem:[#allocation5 + $0x28] sm:$0xff]
    %v103 = vld [vmem:[#allocation5 + $0x30] sm:$0xff]
    %v104 = vld [vmem:[#allocation5 + $0x38] sm:$0xff]
    %v105 = vld [vmem:[#allocation5 + $0x40] sm:$0xff]
    %v106 = vld [vmem:[#allocation5 + $0x48] sm:$0xff]
    %v107 = vld [vmem:[#allocation5 + $0x50] sm:$0xff]
    %v108 = vld [vmem:[#allocation5 + $0x58] sm:$0xff]
    %v109 = vld [vmem:[#allocation5 + $0x60] sm:$0xff]
    %v110 = vld [vmem:[#allocation5 + $0x68] sm:$0xff]
    %v111 = vld [vmem:[#allocation5 + $0x70] sm:$0xff]
    %v112 = vld [vmem:[#allocation5 + $0x78] sm:$0xff]
    %v113 = vld [vmem:[%s2] sm:$0x1]
    %v115 = vperm.slane %v113, 0
    %117 = vmatpush.msra.mxu0 %v112
    %118 = vmatpush.msra.mxu0 %v111
    %119 = vmatpush.msra.mxu0 %v110
    %120 = vmatpush.msra.mxu0 %v109
    %121 = vmatpush.msra.mxu0 %v108
    %122 = vmatpush.msra.mxu0 %v107
    %123 = vmatpush.msra.mxu0 %v106
    %124 = vmatpush.msra.mxu0 %v105
    %125 = vmatpush.msra.mxu0 %v104
    %126 = vmatpush.msra.mxu0 %v103
    %127 = vmatpush.msra.mxu0 %v102
    %128 = vmatpush.msra.mxu0 %v101
    %129 = vmatpush.msra.mxu0 %v100
    %130 = vmatpush.msra.mxu0 %v99
    %131 = vmatpush.msra.mxu0 %v98
    %132 = vmatpush.msra.mxu0 %v97
    %133 = vmatmul.f32.gmra.mxu0 %v96
    %v134 = vpop.f32.mrf.mxu0
    %v135 = vadd.f32 %v115, %v134
    %136 = vdwg.mxu0
    %v137 = vmax.f32 %v135, 0.0
    %v138 = vld [vmem:[#allocation7] sm:$0xff]
    %v139 = vld [vmem:[#allocation7 + $0x8] sm:$0xff]
    %v140 = vld [vmem:[#allocation7 + $0x10] sm:$0xff]
    %v141 = vld [vmem:[#allocation7 + $0x18] sm:$0xff]
    %v142 = vld [vmem:[#allocation7 + $0x20] sm:$0xff]
    %v143 = vld [vmem:[#allocation7 + $0x28] sm:$0xff]
    %v144 = vld [vmem:[#allocation7 + $0x30] sm:$0xff]
    %v145 = vld [vmem:[#allocation7 + $0x38] sm:$0xff]
    %v146 = vld [vmem:[#allocation7 + $0x40] sm:$0xff]
    %v147 = vld [vmem:[#allocation7 + $0x48] sm:$0xff]
    %v148 = vld [vmem:[#allocation7 + $0x50] sm:$0xff]
    %v149 = vld [vmem:[#allocation7 + $0x58] sm:$0xff]
    %v150 = vld [vmem:[#allocation7 + $0x60] sm:$0xff]
    %v151 = vld [vmem:[#allocation7 + $0x68] sm:$0xff]
    %v152 = vld [vmem:[#allocation7 + $0x70] sm:$0xff]
    %v153 = vld [vmem:[#allocation7 + $0x78] sm:$0xff]
    %v154 = vld [vmem:[%s4] sm:$0x1]
    %v156 = vperm.slane %v154, 0
    %158 = vmatpush.msra.mxu0 %v153
    %159 = vmatpush.msra.mxu0 %v152
    %160 = vmatpush.msra.mxu0 %v151
    %161 = vmatpush.msra.mxu0 %v150
    %162 = vmatpush.msra.mxu0 %v149
    %163 = vmatpush.msra.mxu0 %v148
    %164 = vmatpush.msra.mxu0 %v147
    %165 = vmatpush.msra.mxu0 %v146
    %166 = vmatpush.msra.mxu0 %v145
    %167 = vmatpush.msra.mxu0 %v144
    %168 = vmatpush.msra.mxu0 %v143
    %169 = vmatpush.msra.mxu0 %v142
    %170 = vmatpush.msra.mxu0 %v141
    %171 = vmatpush.msra.mxu0 %v140
    %172 = vmatpush.msra.mxu0 %v139
    %173 = vmatpush.msra.mxu0 %v138
    %174 = vmatmul.f32.gmra.mxu0 %v137
    %v175 = vpop.f32.mrf.mxu0
    %v176 = vadd.f32 %v156, %v175
    %177 = vdwg.mxu0
    %v178 = vmax.f32 %v176, 0.0
    %v179 = vld [vmem:[#allocation8] sm:$0xff]
    %v180 = vld [vmem:[#allocation8 + $0x8] sm:$0xff]
    %v181 = vld [vmem:[#allocation8 + $0x10] sm:$0xff]
    %v182 = vld [vmem:[#allocation8 + $0x18] sm:$0xff]
    %v183 = vld [vmem:[#allocation8 + $0x20] sm:$0xff]
    %v184 = vld [vmem:[#allocation8 + $0x28] sm:$0xff]
    %v185 = vld [vmem:[#allocation8 + $0x30] sm:$0xff]
    %v186 = vld [vmem:[#allocation8 + $0x38] sm:$0xff]
    %v187 = vld [vmem:[#allocation8 + $0x40] sm:$0xff]
    %v188 = vld [vmem:[#allocation8 + $0x48] sm:$0xff]
    %v189 = vld [vmem:[#allocation8 + $0x50] sm:$0xff]
    %v190 = vld [vmem:[#allocation8 + $0x58] sm:$0xff]
    %v191 = vld [vmem:[#allocation8 + $0x60] sm:$0xff]
    %v192 = vld [vmem:[#allocation8 + $0x68] sm:$0xff]
    %v193 = vld [vmem:[#allocation8 + $0x70] sm:$0xff]
    %v194 = vld [vmem:[#allocation8 + $0x78] sm:$0xff]
    %v195 = vld [vmem:[%s6] sm:$0x1]
    %v197 = vperm.slane %v195, 0
    %199 = vmatpush.msra.mxu0 %v194
    %200 = vmatpush.msra.mxu0 %v193
    %201 = vmatpush.msra.mxu0 %v192
    %202 = vmatpush.msra.mxu0 %v191
    %203 = vmatpush.msra.mxu0 %v190
    %204 = vmatpush.msra.mxu0 %v189
    %205 = vmatpush.msra.mxu0 %v188
    %206 = vmatpush.msra.mxu0 %v187
    %207 = vmatpush.msra.mxu0 %v186
    %208 = vmatpush.msra.mxu0 %v185
    %209 = vmatpush.msra.mxu0 %v184
    %210 = vmatpush.msra.mxu0 %v183
    %211 = vmatpush.msra.mxu0 %v182
    %212 = vmatpush.msra.mxu0 %v181
    %213 = vmatpush.msra.mxu0 %v180
    %214 = vmatpush.msra.mxu0 %v179
    %215 = vmatmul.f32.gmra.mxu0 %v178
    %v216 = vpop.f32.mrf.mxu0
    %v217 = vadd.f32 %v197, %v216
    %218 = vdwg.mxu0
    %v219 = vld [vmem:[%s7] sm:$0x1]
    %v221 = vperm.slane %v219, 0
    %v223 = vmax.f32 %v217, %v221
    %v224 = vld [vmem:[%s8] sm:$0x1]
    %v226 = vperm.slane %v224, 0
    %v228 = vmin.f32 %v223, %v226
    %v229 = vpack.c.bf16 %v228, %v228
    %v231 = vrot.slane %v229, 3
    %vm232 = vcmask 1040384
    %v235 = vsel %vm232, %v229, %v231
    %vm236 = vcmask 1041409
    %v237 = vsel %vm236, %v229, %v231
    %v239 = vrot.slane %v237, 1
    %vm240 = vcmask 1042434
    %v241 = vsel %vm240, %v229, %v231
    %v243 = vrot.slane %v241, 2
    %vm244 = vcmask 1043459
    %v245 = vsel %vm244, %v229, %v231
    %v247 = vrot.slane %v245, 3
    %252 = vst [vmem:[#allocation10] sm:$0x1] %v235
    %253 = vst [vmem:[#allocation10 + $0x1] sm:$0x1] %v239
    %254 = vst [vmem:[#allocation10 + $0x2] sm:$0x1] %v243
    %255 = vst [vmem:[#allocation10 + $0x3] sm:$0x1] %v247
    // Predicated region
    $region54: #{tpu_custom_call.1} parent=1 // pred_check
      _
    $region55: #{tpu_custom_call.1} parent=1 // pred_check_branch
      %257 = sbr.rel (0) target = $region57
    $region56: #{tpu_custom_call.1} parent=1 // pred_region
      %259 = vsyncadd [#allocation4], 48
      %s260 = sshll.u32 [#allocation10], 4
      %s261 = int_to_ptr.vmem [resolvable:$true] %s260
      %s262 = sshll.u32 %s9, 4
      %s263 = int_to_ptr.hbm [resolvable:$true] %s262
      %268 = dma.vmem_to_hbm [thread:$0]  %s261, 16, %s263, [#allocation4], 16, 16, 1
    $region57: #{tpu_custom_call.1} parent=1 // pred_fallthru
      _
    // Predicated region
    $region58: #{tpu_custom_call.1} parent=1 // pred_check
      _
    $region59: #{tpu_custom_call.1} parent=1 // pred_check_branch
      %270 = sbr.rel (0) target = $region61
    $region60: #{tpu_custom_call.1} parent=1 // pred_region
      %272 = dma.done [#allocation4], 64
    $region61: #{tpu_custom_call.1} parent=1 // pred_fallthru
      _
    %273 = vsyncpa [#allocation3], 1
    %274 = vsyncpa [#allocation6], 1
    %275 = vsyncpa [#allocation9], 1
    %276 = vsyncpa [#allocation4], 1

</llo_original>
